<compile_context>
chip_gen: v5e
topology: v5e:2x2
jax: 0.10.0
libtpu: 0.0.40
codegen_flags: <defaults>
</compile_context>

<pallas_src>
import jax
import jax.numpy as jnp
from jax import lax
from jax.experimental import pallas as pl
from jax.experimental.pallas import tpu as pltpu

MARGIN = 0.3
EPS = 1e-12                 # F.normalize default eps
EPS_SQ = EPS * EPS          # 1/max(||x||, eps) == rsqrt(max(||x||^2, eps^2))


# ---------------------------------------------------------------------------
# Sizing helpers
# ---------------------------------------------------------------------------
def _vmem_cap_bytes():
    try:
        info = pltpu.get_tpu_info()
        for name in ("vmem_capacity_bytes", "vmem_bytes"):
            cap = getattr(info, name, None)
            if cap:
                return int(cap)
    except Exception:
        pass
    return 64 * 1024 * 1024   # conservative: v7x physical VMEM


def _pick_tile(n, candidates, est_fn, budget):
    """Largest candidate dividing n whose VMEM estimate fits the budget; else the
    smallest dividing candidate; else the full axis."""
    divisors = [t for t in candidates if n % t == 0]
    for t in divisors:
        if est_fn(t) <= budget:
            return t
    return divisors[-1] if divisors else n


def _vmem_limit(est, cap):
    # Leave headroom below physical VMEM (matters on v7x's 64 MiB), but never
    # clamp below what the pass actually needs.
    limit = max(est + (4 << 20), 32 << 20)
    return int(min(limit, max(int(0.9 * cap), est + (2 << 20))))


# ---------------------------------------------------------------------------
# Pass 1: s_n = F.normalize(s, dim=-1) written once as bf16 (D_pad, B).
# ---------------------------------------------------------------------------
def _normalize_s_kernel(s_ref, sn_ref):
    s = s_ref[...]                                            # (TD, B) f32
    inv = lax.rsqrt(jnp.maximum(jnp.sum(s * s, axis=-1, keepdims=True), EPS_SQ))
    sn_ref[...] = (s * inv).astype(sn_ref.dtype)              # bf16 out


# ---------------------------------------------------------------------------
# Pass 2: im_n = F.normalize(im, dim=-1) as bf16, plus the diagonal sims
#         sim[k, k] (computed only on diagonal (tb, tb) blocks).
# ---------------------------------------------------------------------------
def _normalize_im_diag_kernel(im_ref, sn_ref, imn_ref, dcol_ref):
    im = im_ref[...]                                          # (TB, D) f32
    inv = lax.rsqrt(jnp.maximum(jnp.sum(im * im, axis=-1, keepdims=True), EPS_SQ))
    imn = (im * inv).astype(jnp.bfloat16)
    imn_ref[...] = imn

    sn = sn_ref[...]                                          # (D, TB) bf16, pre-normalized
    sim = jnp.dot(imn, sn, preferred_element_type=jnp.float32)  # (TB, TB)
    rows = lax.broadcasted_iota(jnp.int32, sim.shape, 0)
    cols = lax.broadcasted_iota(jnp.int32, sim.shape, 1)
    dcol_ref[...] = jnp.sum(jnp.where(rows == cols, sim, 0.0), axis=1, keepdims=True)
    # TODO(synk): when B == tb this diag matmul doubles total MXU work; an
    # elementwise multiply + D-reduction would avoid that for the single-block case.


# ---------------------------------------------------------------------------
# Pass 3: tiled (B, B) similarity grid; hinge epilogue; per-row-block partial
#         sums accumulated over the inner j sweep (sublane reduce only).
# ---------------------------------------------------------------------------
def _make_main_kernel(margin):
    def kernel(imn_ref, sn_ref, d1_ref, d2_ref, out_ref):
        i = pl.program_id(0)
        j = pl.program_id(1)

        @pl.when(j == 0)
        def _init():
            out_ref[...] = jnp.zeros_like(out_ref)

        sim = jnp.dot(imn_ref[...], sn_ref[...],
                      preferred_element_type=jnp.float32)     # (TM, TN) f32
        d1 = d1_ref[...]                                      # (TM, 1)  sim[i, i]
        d2 = d2_ref[...]                                      # (1, TN)  sim[j, j]

        # "1 -" of the cosine loss cancels; work directly with similarities.
        cost = (jnp.maximum(sim - d1 + margin, 0.0)
                + jnp.maximum(sim - d2 + margin, 0.0))

        @pl.when(i == j)
        def _diag_tile():  # square tiles: only diagonal tiles hold diagonal elements
            rows = lax.broadcasted_iota(jnp.int32, cost.shape, 0)
            cols = lax.broadcasted_iota(jnp.int32, cost.shape, 1)
            masked = jnp.where(rows == cols, 0.0, cost)
            psum = jnp.sum(masked, axis=0, keepdims=True)     # (1, TN) sublane reduce
            out_ref[...] += psum.reshape(1, 1, psum.shape[-1])

        @pl.when(i != j)
        def _off_diag_tile():
            psum = jnp.sum(cost, axis=0, keepdims=True)
            out_ref[...] += psum.reshape(1, 1, psum.shape[-1])

    return kernel


# ---------------------------------------------------------------------------
# Wrapper
# ---------------------------------------------------------------------------
def triplet_loss(im, s, margin=MARGIN, block_b=None):
    """im: (B, D), s: (D, B) -> scalar f32 triplet loss (forward only)."""
    B, D = im.shape
    Ds, Bs = s.shape
    if Ds != D or Bs != B:
        raise ValueError(f"shape mismatch: im {im.shape}, s {s.shape}")

    im_f = im.astype(jnp.float32)
    s_f = s.astype(jnp.float32)

    # Zero-pad D to a multiple of 128: inert for the dots (zeros contribute 0) and
    # for the norms (eps clamp handles the all-zero padded feature rows of s).
    D_pad = max(128, ((D + 127) // 128) * 128)
    if D_pad != D:
        im_f = jnp.pad(im_f, ((0, 0), (0, D_pad - D)))
        s_f = jnp.pad(s_f, ((0, D_pad - D), (0, 0)))
    # TODO(synk): B is not padded (padded rows would contaminate the hinge sum without
    # extra masking); ragged / non-tile-multiple B falls back to a single full block.

    cap = _vmem_cap_bytes()
    budget = int(0.72 * cap)

    # ---- pass 1: normalize s once -> s_n (bf16) ---------------------------
    td = _pick_tile(D_pad, (512, 256, 128),
                    lambda t: 12 * t * B + (1 << 20), budget)
    s_n = pl.pallas_call(
        _normalize_s_kernel,
        grid=(D_pad // td,),
        in_specs=[pl.BlockSpec((td, B), lambda d: (d, 0))],
        out_specs=pl.BlockSpec((td, B), lambda d: (d, 0)),
        out_shape=jax.ShapeDtypeStruct((D_pad, B), jnp.bfloat16),
        compiler_params=pltpu.CompilerParams(
            dimension_semantics=("parallel",),
            vmem_limit_bytes=_vmem_limit(12 * td * B + (1 << 20), cap)),
    )(s_f)

    # ---- pass 2: normalize im once -> im_n (bf16) + diagonal sims ---------
    est2 = lambda t: 16 * t * D_pad + 8 * t * t + (2 << 20)
    tb2 = _pick_tile(B, (256, 128), est2, budget)
    im_n, d_col = pl.pallas_call(
        _normalize_im_diag_kernel,
        grid=(B // tb2,),
        in_specs=[
            pl.BlockSpec((tb2, D_pad), lambda b: (b, 0)),
            pl.BlockSpec((D_pad, tb2), lambda b: (0, b)),
        ],
        out_specs=(
            pl.BlockSpec((tb2, D_pad), lambda b: (b, 0)),
            pl.BlockSpec((tb2, 1), lambda b: (b, 0)),
        ),
        out_shape=(
            jax.ShapeDtypeStruct((B, D_pad), jnp.bfloat16),
            jax.ShapeDtypeStruct((B, 1), jnp.float32),
        ),
        compiler_params=pltpu.CompilerParams(
            dimension_semantics=("parallel",),
            vmem_limit_bytes=_vmem_limit(est2(tb2), cap)),
    )(im_f, s_n)

    d_row = d_col.reshape(1, B)   # diag as a row, built in the wrapper (no extra kernel output)

    # ---- pass 3: tiled similarity grid + hinge + per-row-block partials ----
    est3 = lambda t: 8 * t * D_pad + 16 * t * t + (2 << 20)
    tb = block_b if block_b is not None else _pick_tile(B, (1024, 512, 256, 128), est3, budget)
    assert B % tb == 0, f"block_b={tb} must divide B={B}"
    ni = nj = B // tb

    cost_est = pl.CostEstimate(
        flops=2 * B * B * D_pad,
        transcendentals=0,
        bytes_accessed=2 * B * D_pad * (1 + ni) + 4 * (B * ni + B * nj + B),
    )

    partial = pl.pallas_call(
        _make_main_kernel(float(margin)),
        grid=(ni, nj),
        in_specs=[
            pl.BlockSpec((tb, D_pad), lambda i, j: (i, 0)),   # im_n rows of block i (resident over j)
            pl.BlockSpec((D_pad, tb), lambda i, j: (0, j)),   # s_n cols of block j (streamed)
            pl.BlockSpec((tb, 1), lambda i, j: (i, 0)),       # sim diag for these rows
            pl.BlockSpec((1, tb), lambda i, j: (0, j)),       # sim diag for these cols
        ],
        out_specs=pl.BlockSpec((1, 1, tb), lambda i, j: (i, 0, 0)),
        out_shape=jax.ShapeDtypeStruct((ni, 1, tb), jnp.float32),
        compiler_params=pltpu.CompilerParams(
            # i is independent (per-row-block accumulator) -> parallel across TCs on v7x;
            # j is the reduction sweep -> arbitrary (and last in the grid).
            dimension_semantics=("parallel", "arbitrary"),
            vmem_limit_bytes=_vmem_limit(est3(tb), cap)),
        cost_estimate=cost_est,
    )(im_n, s_n, d_col, d_row)

    # Final tiny reduce + mean scaling in the wrapper (B elements).
    return jnp.sum(partial) * (1.0 / float(B * B))


# ---------------------------------------------------------------------------
# Pure-JAX f32 reference mirroring the PyTorch module exactly.
# ---------------------------------------------------------------------------
def _triplet_loss_ref(im, s, margin=MARGIN):
    im_n = im / jnp.maximum(jnp.sqrt(jnp.sum(im * im, -1, keepdims=True)), EPS)
    s_n = s / jnp.maximum(jnp.sqrt(jnp.sum(s * s, -1, keepdims=True)), EPS)
    scores = 1.0 - im_n @ s_n
    d = jnp.diag(scores)
    cost_im = jnp.maximum(d[:, None] - scores + margin, 0.0)
    cost_s = jnp.maximum(d[None, :] - scores + margin, 0.0)
    mask = 1.0 - jnp.eye(scores.shape[0], dtype=scores.dtype)
    return jnp.mean((cost_im + cost_s) * mask)


if __name__ == "__main__":
    B, D = 8, 32
    key = jax.random.PRNGKey(0)
    k_im, k_s = jax.random.split(key)
    im = jax.random.normal(k_im, (B, D), dtype=jnp.float32)
    s = jax.random.normal(k_s, (D, B), dtype=jnp.float32)

    loss = jax.block_until_ready(triplet_loss(im, s))
    ref = _triplet_loss_ref(im, s)

    assert jnp.isfinite(loss), "kernel produced non-finite loss"
    assert abs(float(loss) - float(ref)) < 5e-2, (float(loss), float(ref))
    print("KERNEL_OK")
</pallas_src>

<mosaic_0001>
module attributes {stable_mosaic.version = 11 : i64} {
  func.func @_normalize_s_kernel(%arg0: i32, %arg1: memref<128x8xf32, #tpu.memory_space<vmem>>, %arg2: memref<128x8xbf16, #tpu.memory_space<vmem>>) attributes {dimension_semantics = [#tpu.dimension_semantics<parallel>], iteration_bounds = array<i64: 1>, scalar_prefetch = 0 : i64, scratch_operands = 0 : i64, tpu.core_type = #tpu.core_type<tc>, window_params = [{transform_indices = @transform_0, window_bounds = array<i64: 128, 8>}, {transform_indices = @transform_1, window_bounds = array<i64: 128, 8>}]} {
    %c0 = arith.constant 0 : index
    %c0_0 = arith.constant 0 : index
    %0 = vector.load %arg1[%c0, %c0_0] : memref<128x8xf32, #tpu.memory_space<vmem>>, vector<128x8xf32>
    %1 = arith.mulf %0, %0 : vector<128x8xf32>
    %cst = arith.constant dense<0.000000e+00> : vector<128xf32>
    %2 = vector.multi_reduction <add>, %1, %cst [1] : vector<128x8xf32> to vector<128xf32>
    %3 = vector.shape_cast %2 : vector<128xf32> to vector<128x1xf32>
    %cst_1 = arith.constant 1.000000e-24 : f32
    %4 = vector.broadcast %cst_1 : f32 to vector<128x1xf32>
    %5 = arith.maximumf %3, %4 : vector<128x1xf32>
    %6 = math.rsqrt %5 : vector<128x1xf32>
    %7 = vector.broadcast %6 : vector<128x1xf32> to vector<128x8xf32>
    %8 = arith.mulf %0, %7 : vector<128x8xf32>
    %9 = arith.truncf %8 : vector<128x8xf32> to vector<128x8xbf16>
    %c0_2 = arith.constant 0 : index
    %c0_3 = arith.constant 0 : index
    %10 = vector.load %arg2[%c0_2, %c0_3] : memref<128x8xbf16, #tpu.memory_space<vmem>>, vector<128x8xbf16>
    tpu.vector_store %arg2[%c0_2, %c0_3], %9 {strides = array<i32>} : memref<128x8xbf16, #tpu.memory_space<vmem>>, vector<128x8xbf16>,
    return
  }
  func.func @transform_0(%arg0: i32) -> (i32, i32) {
    %c0_i32 = arith.constant 0 : i32
    %c0_i32_0 = arith.constant 0 : i32
    return %arg0, %c0_i32 : i32, i32
  }
  func.func @transform_1(%arg0: i32) -> (i32, i32) {
    %c0_i32 = arith.constant 0 : i32
    %c0_i32_0 = arith.constant 0 : i32
    return %arg0, %c0_i32 : i32, i32
  }
}

</mosaic_0001>

<llo_original>
// kernel: tpu_custom_call.1
$region0: #{tpu_custom_call.1}
  #allocation0 [shape = 'u32[]', space=smem, size = 0x4, offset = 0x4, fixed_abs, tag = 'smem constant byte address 0x4 - core index']
  #allocation1 [shape = 'u32[72,128]{1,0:T(1,128)}', space=vmem, size = 0x9000, scoped, tag = 'internal scratch']
  %s0 = inlined_call_operand.vmem [shape: f32[128,8], index: 0, kind: input, shape index: {}]
  %s1 = inlined_call_operand.vmem [shape: bf16[128,8], index: 1, kind: output, shape index: {}]
  %s2 = sld [smem:[#allocation0]]
  $region14: #{tpu_custom_call.1} parent=0
    _
  %s4 = ssub.s32 1, %s2
  %s5 = scalar_select 0, %s4, %s2
  // Predicated region
  $region2: #{tpu_custom_call.1} parent=0 // pred_check
    _
  $region3: #{tpu_custom_call.1} parent=0 // pred_check_branch
    %7 = sbr.rel (0) target = $region5
  $region4: #{tpu_custom_call.1} parent=0 // pred_region
    _
  $region5: #{tpu_custom_call.1} parent=0 // pred_fallthru
    _
  %v8 = vld [vmem:[%s0] sm:$0xff]
  %v9 = vld [vmem:[%s0 + $0x8] sm:$0xff]
  %v10 = vld [vmem:[%s0 + $0x10] sm:$0xff]
  %v11 = vld [vmem:[%s0 + $0x18] sm:$0xff]
  %v12 = vld [vmem:[%s0 + $0x20] sm:$0xff]
  %v13 = vld [vmem:[%s0 + $0x28] sm:$0xff]
  %v14 = vld [vmem:[%s0 + $0x30] sm:$0xff]
  %v15 = vld [vmem:[%s0 + $0x38] sm:$0xff]
  %v16 = vld [vmem:[%s0 + $0x40] sm:$0xff]
  %v17 = vld [vmem:[%s0 + $0x48] sm:$0xff]
  %v18 = vld [vmem:[%s0 + $0x50] sm:$0xff]
  %v19 = vld [vmem:[%s0 + $0x58] sm:$0xff]
  %v20 = vld [vmem:[%s0 + $0x60] sm:$0xff]
  %v21 = vld [vmem:[%s0 + $0x68] sm:$0xff]
  %v22 = vld [vmem:[%s0 + $0x70] sm:$0xff]
  %v23 = vld [vmem:[%s0 + $0x78] sm:$0xff]
  %v24 = vmul.f32 %v8, %v8
  %v25 = vmul.f32 %v9, %v9
  %v26 = vmul.f32 %v10, %v10
  %v27 = vmul.f32 %v11, %v11
  %v28 = vmul.f32 %v12, %v12
  %v29 = vmul.f32 %v13, %v13
  %v30 = vmul.f32 %v14, %v14
  %v31 = vmul.f32 %v15, %v15
  %v32 = vmul.f32 %v16, %v16
  %v33 = vmul.f32 %v17, %v17
  %v34 = vmul.f32 %v18, %v18
  %v35 = vmul.f32 %v19, %v19
  %v36 = vmul.f32 %v20, %v20
  %v37 = vmul.f32 %v21, %v21
  %v38 = vmul.f32 %v22, %v22
  %v39 = vmul.f32 %v23, %v23
  %vm40 = vcmask 64512
  %v41 = vsel %vm40, %v24, 0.0
  %42 = vadd.xlane.f32.xlu0 %v41
  %v43 = vpop.xlane.xlu0 %42
  %v44 = vsel %vm40, %v25, 0.0
  %45 = vadd.xlane.f32.xlu0 %v44
  %v46 = vpop.xlane.xlu0 %45
  %v47 = vsel %vm40, %v26, 0.0
  %48 = vadd.xlane.f32.xlu0 %v47
  %v49 = vpop.xlane.xlu0 %48
  %v50 = vsel %vm40, %v27, 0.0
  %51 = vadd.xlane.f32.xlu0 %v50
  %v52 = vpop.xlane.xlu0 %51
  %v53 = vsel %vm40, %v28, 0.0
  %54 = vadd.xlane.f32.xlu0 %v53
  %v55 = vpop.xlane.xlu0 %54
  %v56 = vsel %vm40, %v29, 0.0
  %57 = vadd.xlane.f32.xlu0 %v56
  %v58 = vpop.xlane.xlu0 %57
  %v59 = vsel %vm40, %v30, 0.0
  %60 = vadd.xlane.f32.xlu0 %v59
  %v61 = vpop.xlane.xlu0 %60
  %v62 = vsel %vm40, %v31, 0.0
  %63 = vadd.xlane.f32.xlu0 %v62
  %v64 = vpop.xlane.xlu0 %63
  %v65 = vsel %vm40, %v32, 0.0
  %66 = vadd.xlane.f32.xlu0 %v65
  %v67 = vpop.xlane.xlu0 %66
  %v68 = vsel %vm40, %v33, 0.0
  %69 = vadd.xlane.f32.xlu0 %v68
  %v70 = vpop.xlane.xlu0 %69
  %v71 = vsel %vm40, %v34, 0.0
  %72 = vadd.xlane.f32.xlu0 %v71
  %v73 = vpop.xlane.xlu0 %72
  %v74 = vsel %vm40, %v35, 0.0
  %75 = vadd.xlane.f32.xlu0 %v74
  %v76 = vpop.xlane.xlu0 %75
  %v77 = vsel %vm40, %v36, 0.0
  %78 = vadd.xlane.f32.xlu0 %v77
  %v79 = vpop.xlane.xlu0 %78
  %v80 = vsel %vm40, %v37, 0.0
  %81 = vadd.xlane.f32.xlu0 %v80
  %v82 = vpop.xlane.xlu0 %81
  %v83 = vsel %vm40, %v38, 0.0
  %84 = vadd.xlane.f32.xlu0 %v83
  %v85 = vpop.xlane.xlu0 %84
  %v86 = vsel %vm40, %v39, 0.0
  %87 = vadd.xlane.f32.xlu0 %v86
  %v88 = vpop.xlane.xlu0 %87
  %v89 = vmax.f32 %v43, 1e-24
  %v90 = vmax.f32 %v46, 1e-24
  %v91 = vmax.f32 %v49, 1e-24
  %v92 = vmax.f32 %v52, 1e-24
  %v93 = vmax.f32 %v55, 1e-24
  %v94 = vmax.f32 %v58, 1e-24
  %v95 = vmax.f32 %v61, 1e-24
  %v96 = vmax.f32 %v64, 1e-24
  %v97 = vmax.f32 %v67, 1e-24
  %v98 = vmax.f32 %v70, 1e-24
  %v99 = vmax.f32 %v73, 1e-24
  %v100 = vmax.f32 %v76, 1e-24
  %v101 = vmax.f32 %v79, 1e-24
  %v102 = vmax.f32 %v82, 1e-24
  %v103 = vmax.f32 %v85, 1e-24
  %v104 = vmax.f32 %v88, 1e-24
  %v105 = vrsqrt.pop %v89
  %v106 = vmul.f32 %v105, %v89
  %v107 = vmul.f32 %v106, %v105
  %v108 = vmul.f32 0.5, %v107
  %v109 = vsub.f32 1.5, %v108
  %v110 = vmul.f32 %v105, %v109
  %vm111 = vweird.f32 %v89
  %vm112 = vweird.f32 %v105
  %vm113 = vmor %vm111, %vm112
  %v114 = vsel %vm113, %v105, %v110
  %v115 = vrsqrt.pop %v90
  %v116 = vmul.f32 %v115, %v90
  %v117 = vmul.f32 %v116, %v115
  %v118 = vmul.f32 0.5, %v117
  %v119 = vsub.f32 1.5, %v118
  %v120 = vmul.f32 %v115, %v119
  %vm121 = vweird.f32 %v90
  %vm122 = vweird.f32 %v115
  %vm123 = vmor %vm121, %vm122
  %v124 = vsel %vm123, %v115, %v120
  %v125 = vrsqrt.pop %v91
  %v126 = vmul.f32 %v125, %v91
  %v127 = vmul.f32 %v126, %v125
  %v128 = vmul.f32 0.5, %v127
  %v129 = vsub.f32 1.5, %v128
  %v130 = vmul.f32 %v125, %v129
  %vm131 = vweird.f32 %v91
  %vm132 = vweird.f32 %v125
  %vm133 = vmor %vm131, %vm132
  %v134 = vsel %vm133, %v125, %v130
  %v135 = vrsqrt.pop %v92
  %v136 = vmul.f32 %v135, %v92
  %v137 = vmul.f32 %v136, %v135
  %v138 = vmul.f32 0.5, %v137
  %v139 = vsub.f32 1.5, %v138
  %v140 = vmul.f32 %v135, %v139
  %vm141 = vweird.f32 %v92
  %vm142 = vweird.f32 %v135
  %vm143 = vmor %vm141, %vm142
  %v144 = vsel %vm143, %v135, %v140
  %v145 = vrsqrt.pop %v93
  %v146 = vmul.f32 %v145, %v93
  %v147 = vmul.f32 %v146, %v145
  %v148 = vmul.f32 0.5, %v147
  %v149 = vsub.f32 1.5, %v148
  %v150 = vmul.f32 %v145, %v149
  %vm151 = vweird.f32 %v93
  %vm152 = vweird.f32 %v145
  %vm153 = vmor %vm151, %vm152
  %v154 = vsel %vm153, %v145, %v150
  %v155 = vrsqrt.pop %v94
  %v156 = vmul.f32 %v155, %v94
  %v157 = vmul.f32 %v156, %v155
  %v158 = vmul.f32 0.5, %v157
  %v159 = vsub.f32 1.5, %v158
  %v160 = vmul.f32 %v155, %v159
  %vm161 = vweird.f32 %v94
  %vm162 = vweird.f32 %v155
  %vm163 = vmor %vm161, %vm162
  %v164 = vsel %vm163, %v155, %v160
  %v165 = vrsqrt.pop %v95
  %v166 = vmul.f32 %v165, %v95
  %v167 = vmul.f32 %v166, %v165
  %v168 = vmul.f32 0.5, %v167
  %v169 = vsub.f32 1.5, %v168
  %v170 = vmul.f32 %v165, %v169
  %vm171 = vweird.f32 %v95
  %vm172 = vweird.f32 %v165
  %vm173 = vmor %vm171, %vm172
  %v174 = vsel %vm173, %v165, %v170
  %v175 = vrsqrt.pop %v96
  %v176 = vmul.f32 %v175, %v96
  %v177 = vmul.f32 %v176, %v175
  %v178 = vmul.f32 0.5, %v177
  %v179 = vsub.f32 1.5, %v178
  %v180 = vmul.f32 %v175, %v179
  %vm181 = vweird.f32 %v96
  %vm182 = vweird.f32 %v175
  %vm183 = vmor %vm181, %vm182
  %v184 = vsel %vm183, %v175, %v180
  %v185 = vrsqrt.pop %v97
  %v186 = vmul.f32 %v185, %v97
  %v187 = vmul.f32 %v186, %v185
  %v188 = vmul.f32 0.5, %v187
  %v189 = vsub.f32 1.5, %v188
  %v190 = vmul.f32 %v185, %v189
  %vm191 = vweird.f32 %v97
  %vm192 = vweird.f32 %v185
  %vm193 = vmor %vm191, %vm192
  %v194 = vsel %vm193, %v185, %v190
  %v195 = vrsqrt.pop %v98
  %v196 = vmul.f32 %v195, %v98
  %v197 = vmul.f32 %v196, %v195
  %v198 = vmul.f32 0.5, %v197
  %v199 = vsub.f32 1.5, %v198
  %v200 = vmul.f32 %v195, %v199
  %vm201 = vweird.f32 %v98
  %vm202 = vweird.f32 %v195
  %vm203 = vmor %vm201, %vm202
  %v204 = vsel %vm203, %v195, %v200
  %v205 = vrsqrt.pop %v99
  %v206 = vmul.f32 %v205, %v99
  %v207 = vmul.f32 %v206, %v205
  %v208 = vmul.f32 0.5, %v207
  %v209 = vsub.f32 1.5, %v208
  %v210 = vmul.f32 %v205, %v209
  %vm211 = vweird.f32 %v99
  %vm212 = vweird.f32 %v205
  %vm213 = vmor %vm211, %vm212
  %v214 = vsel %vm213, %v205, %v210
  %v215 = vrsqrt.pop %v100
  %v216 = vmul.f32 %v215, %v100
  %v217 = vmul.f32 %v216, %v215
  %v218 = vmul.f32 0.5, %v217
  %v219 = vsub.f32 1.5, %v218
  %v220 = vmul.f32 %v215, %v219
  %vm221 = vweird.f32 %v100
  %vm222 = vweird.f32 %v215
  %vm223 = vmor %vm221, %vm222
  %v224 = vsel %vm223, %v215, %v220
  %v225 = vrsqrt.pop %v101
  %v226 = vmul.f32 %v225, %v101
  %v227 = vmul.f32 %v226, %v225
  %v228 = vmul.f32 0.5, %v227
  %v229 = vsub.f32 1.5, %v228
  %v230 = vmul.f32 %v225, %v229
  %vm231 = vweird.f32 %v101
  %vm232 = vweird.f32 %v225
  %vm233 = vmor %vm231, %vm232
  %v234 = vsel %vm233, %v225, %v230
  %v235 = vrsqrt.pop %v102
  %v236 = vmul.f32 %v235, %v102
  %v237 = vmul.f32 %v236, %v235
  %v238 = vmul.f32 0.5, %v237
  %v239 = vsub.f32 1.5, %v238
  %v240 = vmul.f32 %v235, %v239
  %vm241 = vweird.f32 %v102
  %vm242 = vweird.f32 %v235
  %vm243 = vmor %vm241, %vm242
  %v244 = vsel %vm243, %v235, %v240
  %v245 = vrsqrt.pop %v103
  %v246 = vmul.f32 %v245, %v103
  %v247 = vmul.f32 %v246, %v245
  %v248 = vmul.f32 0.5, %v247
  %v249 = vsub.f32 1.5, %v248
  %v250 = vmul.f32 %v245, %v249
  %vm251 = vweird.f32 %v103
  %vm252 = vweird.f32 %v245
  %vm253 = vmor %vm251, %vm252
  %v254 = vsel %vm253, %v245, %v250
  %v255 = vrsqrt.pop %v104
  %v256 = vmul.f32 %v255, %v104
  %v257 = vmul.f32 %v256, %v255
  %v258 = vmul.f32 0.5, %v257
  %v259 = vsub.f32 1.5, %v258
  %v260 = vmul.f32 %v255, %v259
  %vm261 = vweird.f32 %v104
  %vm262 = vweird.f32 %v255
  %vm263 = vmor %vm261, %vm262
  %v264 = vsel %vm263, %v255, %v260
  %v265 = vmul.f32 %v8, %v114
  %v266 = vmul.f32 %v9, %v124
  %v267 = vmul.f32 %v10, %v134
  %v268 = vmul.f32 %v11, %v144
  %v269 = vmul.f32 %v12, %v154
  %v270 = vmul.f32 %v13, %v164
  %v271 = vmul.f32 %v14, %v174
  %v272 = vmul.f32 %v15, %v184
  %v273 = vmul.f32 %v16, %v194
  %v274 = vmul.f32 %v17, %v204
  %v275 = vmul.f32 %v18, %v214
  %v276 = vmul.f32 %v19, %v224
  %v277 = vmul.f32 %v20, %v234
  %v278 = vmul.f32 %v21, %v244
  %v279 = vmul.f32 %v22, %v254
  %v280 = vmul.f32 %v23, %v264
  %v281 = vpack.c.bf16 %v265, %v265
  %v282 = vpack.c.bf16 %v266, %v266
  %v283 = vpack.c.bf16 %v267, %v267
  %v284 = vpack.c.bf16 %v268, %v268
  %v285 = vpack.c.bf16 %v269, %v269
  %v286 = vpack.c.bf16 %v270, %v270
  %v287 = vpack.c.bf16 %v271, %v271
  %v288 = vpack.c.bf16 %v272, %v272
  %v289 = vpack.c.bf16 %v273, %v273
  %v290 = vpack.c.bf16 %v274, %v274
  %v291 = vpack.c.bf16 %v275, %v275
  %v292 = vpack.c.bf16 %v276, %v276
  %v293 = vpack.c.bf16 %v277, %v277
  %v294 = vpack.c.bf16 %v278, %v278
  %v295 = vpack.c.bf16 %v279, %v279
  %v296 = vpack.c.bf16 %v280, %v280
  %vm297 = vcmask 60416
  %298 = vst.msk [vmem:[%s1] sm:$0xf] %vm297, %v281
  %299 = vst.msk [vmem:[%s1 + $0x4] sm:$0xf] %vm297, %v282
  %300 = vst.msk [vmem:[%s1 + $0x8] sm:$0xf] %vm297, %v283
  %301 = vst.msk [vmem:[%s1 + $0xc] sm:$0xf] %vm297, %v284
  %302 = vst.msk [vmem:[%s1 + $0x10] sm:$0xf] %vm297, %v285
  %303 = vst.msk [vmem:[%s1 + $0x14] sm:$0xf] %vm297, %v286
  %304 = vst.msk [vmem:[%s1 + $0x18] sm:$0xf] %vm297, %v287
  %305 = vst.msk [vmem:[%s1 + $0x1c] sm:$0xf] %vm297, %v288
  %306 = vst.msk [vmem:[%s1 + $0x20] sm:$0xf] %vm297, %v289
  %307 = vst.msk [vmem:[%s1 + $0x24] sm:$0xf] %vm297, %v290
  %308 = vst.msk [vmem:[%s1 + $0x28] sm:$0xf] %vm297, %v291
  %309 = vst.msk [vmem:[%s1 + $0x2c] sm:$0xf] %vm297, %v292
  %310 = vst.msk [vmem:[%s1 + $0x30] sm:$0xf] %vm297, %v293
  %311 = vst.msk [vmem:[%s1 + $0x34] sm:$0xf] %vm297, %v294
  %312 = vst.msk [vmem:[%s1 + $0x38] sm:$0xf] %vm297, %v295
  %313 = vst.msk [vmem:[%s1 + $0x3c] sm:$0xf] %vm297, %v296
  // Predicated region
  $region6: #{tpu_custom_call.1} parent=0 // pred_check
    _
  $region7: #{tpu_custom_call.1} parent=0 // pred_check_branch
    %315 = sbr.rel (0) target = $region9
  $region8: #{tpu_custom_call.1} parent=0 // pred_region
    _
  $region9: #{tpu_custom_call.1} parent=0 // pred_fallthru
    _
  // Predicated region
  $region10: #{tpu_custom_call.1} parent=0 // pred_check
    _
  $region11: #{tpu_custom_call.1} parent=0 // pred_check_branch
    %317 = sbr.rel (0) target = $region13
  $region12: #{tpu_custom_call.1} parent=0 // pred_region
    _
  $region13: #{tpu_custom_call.1} parent=0 // pred_fallthru
    _

</llo_original>
